<compile_context>
chip_gen: v6e
topology: v6e:2x2x1
jax: 0.10.0
libtpu: 0.0.40
codegen_flags: <defaults>
</compile_context>

<pallas_src>
import math

import jax
import jax.numpy as jnp
from jax.experimental import pallas as pl
from jax.experimental.pallas import tpu as pltpu

EPS = 1e-5
_VMEM_LIMIT = 48 * 1024 * 1024   # > scoped default on v5e/v6e, <= v7x physical


def _rmsnorm(x, w):
    # x: (rows, C) f32, w: (1, C) f32   -- rsqrt goes to the EUP slot
    ms = jnp.mean(x * x, axis=-1, keepdims=True)
    return (x * jax.lax.rsqrt(ms + EPS)) * w


def _const_spec(arr):
    """Full-array BlockSpec with a constant index map (weights / small tables)."""
    nd = arr.ndim
    return pl.BlockSpec(arr.shape, lambda *_g, _nd=nd: (0,) * _nd)


# --------------------------------------------------------------------------------------
# Shared kernel building blocks
# --------------------------------------------------------------------------------------
def _attn_update(xb, qexp_ref, n1w_ref, wkv_ref, bkv_ref, m_sc, l_sc, acc_sc):
    """One online-softmax accumulation step of the latent attention over a T tile.

    xb: (tT, C) f32 activations of this tile.  Scores for ALL heads come from a single
    MXU matmul against the head-block-masked, scale-folded latent queries qexp (H*L, C).
    """
    C = xb.shape[-1]
    # RMSNorm 1 (f32) + fused KV projection (bf16 operands, f32 accumulate)
    n1 = _rmsnorm(xb, n1w_ref[...])
    kv = jnp.dot(n1.astype(jnp.bfloat16), wkv_ref[...],
                 preferred_element_type=jnp.float32) + bkv_ref[...]       # (tT, 2C) f32
    k = kv[:, :C].astype(jnp.bfloat16)                # 128-aligned lane slices
    v = kv[:, C:].astype(jnp.bfloat16)

    # (H*L, C) x (tT, C) contracted on C -> per-head scores, scale already folded in.
    s = jnp.einsum("lc,tc->lt", qexp_ref[...], k,
                   preferred_element_type=jnp.float32)                    # (H*L, tT)

    # Online softmax accumulation across T tiles (f32).
    m_prev = m_sc[...]
    m_new = jnp.maximum(m_prev, jnp.max(s, axis=-1, keepdims=True))
    alpha = jnp.exp(m_prev - m_new)
    p = jnp.exp(s - m_new)
    l_sc[...] = alpha * l_sc[...] + jnp.sum(p, axis=-1, keepdims=True)
    acc_sc[...] = alpha * acc_sc[...] + jnp.dot(
        p.astype(jnp.bfloat16), v, preferred_element_type=jnp.float32)    # (H*L, C)
    m_sc[...] = m_new


def _attn_finalize(maskl_ref, wout_ref, bout_ref, l_sc, acc_sc):
    """Combine accumulators -> per-batch token context (1, C). Runs once per batch."""
    full = acc_sc[...] / l_sc[...]                                        # exact divide
    # mean over latents + head-block selection folded into one masked reduction
    ctx_in = jnp.sum(full * maskl_ref[...], axis=0, keepdims=True)        # (1, C)
    return jnp.dot(ctx_in.astype(jnp.bfloat16), wout_ref[...],
                   preferred_element_type=jnp.float32) + bout_ref[...]


def _init_attn_scratch(m_sc, l_sc, acc_sc):
    m_sc[...] = jnp.full(m_sc.shape, -jnp.inf, m_sc.dtype)
    l_sc[...] = jnp.zeros(l_sc.shape, l_sc.dtype)
    acc_sc[...] = jnp.zeros(acc_sc.shape, acc_sc.dtype)


def _mlp_body(xb, ctxb, n2w_ref, w1_ref, b1_ref, w2_ref, b2_ref):
    """Residual + RMSNorm2 + MLP of one T tile.  Returns new activations (tT, C) f32."""
    x1 = xb + ctxb                                                        # (tT, C) f32
    n2 = _rmsnorm(x1, n2w_ref[...])
    h1 = jnp.dot(n2.astype(jnp.bfloat16), w1_ref[...],
                 preferred_element_type=jnp.float32) + b1_ref[...]        # (tT, 4C) f32
    h1 = jax.nn.gelu(h1, approximate=True)
    y = jnp.dot(h1.astype(jnp.bfloat16), w2_ref[...],
                preferred_element_type=jnp.float32) + b2_ref[...]         # (tT, C) f32
    return x1 + y


# --------------------------------------------------------------------------------------
# Kernel A: latent attention of block 0 on the embedded activations
# --------------------------------------------------------------------------------------
def _attn_ctx_kernel(x_ref, qexp_ref, maskl_ref, n1w_ref, wkv_ref, bkv_ref,
                     wout_ref, bout_ref, ctx_ref, m_sc, l_sc, acc_sc):
    t = pl.program_id(1)

    @pl.when(t == 0)
    def _init():
        _init_attn_scratch(m_sc, l_sc, acc_sc)

    _attn_update(x_ref[0], qexp_ref, n1w_ref, wkv_ref, bkv_ref, m_sc, l_sc, acc_sc)

    @pl.when(t == pl.num_programs(1) - 1)
    def _finalize():
        ctx_ref[0] = _attn_finalize(maskl_ref, wout_ref, bout_ref, l_sc, acc_sc)


# --------------------------------------------------------------------------------------
# Kernel B: fused [MLP of block i] + [latent attention of block i+1]
#   -> x is read once and written once per block.
# --------------------------------------------------------------------------------------
def _fused_block_kernel(x_ref, ctx_ref,
                        n2w_ref, w1_ref, b1_ref, w2_ref, b2_ref,
                        qexp_ref, maskl_ref, n1w_ref, wkv_ref, bkv_ref,
                        wout_ref, bout_ref,
                        y_ref, ctx_next_ref, m_sc, l_sc, acc_sc):
    t = pl.program_id(1)

    @pl.when(t == 0)
    def _init():
        _init_attn_scratch(m_sc, l_sc, acc_sc)

    # Phase 2 of block i (per-token, independent across T tiles)
    y = _mlp_body(x_ref[0], ctx_ref[0], n2w_ref, w1_ref, b1_ref, w2_ref, b2_ref)
    y_ref[0] = y.astype(y_ref.dtype)

    # Phase 1 of block i+1 on the freshly computed activations (online softmax over T)
    _attn_update(y, qexp_ref, n1w_ref, wkv_ref, bkv_ref, m_sc, l_sc, acc_sc)

    @pl.when(t == pl.num_programs(1) - 1)
    def _finalize():
        ctx_next_ref[0] = _attn_finalize(maskl_ref, wout_ref, bout_ref, l_sc, acc_sc)


# --------------------------------------------------------------------------------------
# Kernel C: MLP of the last block + final RMSNorm + vocab projection
# --------------------------------------------------------------------------------------
def _final_kernel(x_ref, ctx_ref,
                  n2w_ref, w1_ref, b1_ref, w2_ref, b2_ref,
                  nfw_ref, wv_ref, bv_ref, o_ref):
    y = _mlp_body(x_ref[0], ctx_ref[0], n2w_ref, w1_ref, b1_ref, w2_ref, b2_ref)
    nf = _rmsnorm(y, nfw_ref[...])
    o_ref[0] = (jnp.dot(nf.astype(jnp.bfloat16), wv_ref[...],
                        preferred_element_type=jnp.float32)
                + bv_ref[...]).astype(o_ref.dtype)


# --------------------------------------------------------------------------------------
# Wrappers
# --------------------------------------------------------------------------------------
def _prepare_block(p, n_heads, C):
    """Cast weights to bf16 once and pre-expand the latent queries (scale folded in)."""
    bf16 = jnp.bfloat16
    L = p["q_latents"].shape[0]
    hd = C // n_heads
    scale = 1.0 / math.sqrt(hd)
    # Head-expanded latent queries + head-selection mask (built once, outside kernels).
    head_of_row = jnp.repeat(jnp.arange(n_heads), L)                      # (H*L,)
    head_of_col = jnp.arange(C) // hd                                     # (C,)
    mask = (head_of_row[:, None] == head_of_col[None, :]).astype(jnp.float32)
    q_exp = (jnp.tile(p["q_latents"] * scale, (n_heads, 1)) * mask).astype(bf16)
    return {
        "q_exp": q_exp,                       # (H*L, C) bf16, 1/sqrt(hd) folded in
        "mask_l": mask / L,                   # folds mean over latents
        "norm1_w": p["norm1_w"],
        "w_kv": p["w_kv"].astype(bf16),
        "b_kv": p["b_kv"],
        "w_out": p["w_out"].astype(bf16),
        "b_out": p["b_out"],
        "norm2_w": p["norm2_w"],
        "w_mlp1": p["w_mlp1"].astype(bf16),
        "b_mlp1": p["b_mlp1"],
        "w_mlp2": p["w_mlp2"].astype(bf16),
        "b_mlp2": p["b_mlp2"],
    }


def _attn_args(bp):
    return [bp["q_exp"], bp["mask_l"], bp["norm1_w"], bp["w_kv"], bp["b_kv"],
            bp["w_out"], bp["b_out"]]


def _mlp_args(bp):
    return [bp["norm2_w"], bp["w_mlp1"], bp["b_mlp1"], bp["w_mlp2"], bp["b_mlp2"]]


def _attn_scratch(HL, C):
    return [pltpu.VMEM((HL, 1), jnp.float32),    # running max
            pltpu.VMEM((HL, 1), jnp.float32),    # running denom
            pltpu.VMEM((HL, C), jnp.float32)]    # running P@V


def _attn_ctx_call(x, bp, t_tile):
    B, T, C = x.shape
    nT = T // t_tile
    HL = bp["q_exp"].shape[0]
    args = _attn_args(bp)
    return pl.pallas_call(
        _attn_ctx_kernel,
        out_shape=jax.ShapeDtypeStruct((B, 1, C), jnp.float32),
        grid=(B, nT),
        in_specs=([pl.BlockSpec((1, t_tile, C), lambda b, t: (b, t, 0))]
                  + [_const_spec(a) for a in args]),
        out_specs=pl.BlockSpec((1, 1, C), lambda b, t: (b, 0, 0)),
        scratch_shapes=_attn_scratch(HL, C),
        compiler_params=pltpu.CompilerParams(
            dimension_semantics=("parallel", "arbitrary"),
            vmem_limit_bytes=_VMEM_LIMIT),
    )(x, *args)


def _fused_call(x, ctx, bp_cur, bp_next, t_tile):
    B, T, C = x.shape
    nT = T // t_tile
    HL = bp_next["q_exp"].shape[0]
    args = _mlp_args(bp_cur) + _attn_args(bp_next)
    y, ctx_next = pl.pallas_call(
        _fused_block_kernel,
        out_shape=(jax.ShapeDtypeStruct((B, T, C), x.dtype),
                   jax.ShapeDtypeStruct((B, 1, C), jnp.float32)),
        grid=(B, nT),
        in_specs=([pl.BlockSpec((1, t_tile, C), lambda b, t: (b, t, 0)),
                   pl.BlockSpec((1, 1, C), lambda b, t: (b, 0, 0))]
                  + [_const_spec(a) for a in args]),
        out_specs=(pl.BlockSpec((1, t_tile, C), lambda b, t: (b, t, 0)),
                   pl.BlockSpec((1, 1, C), lambda b, t: (b, 0, 0))),
        scratch_shapes=_attn_scratch(HL, C),
        compiler_params=pltpu.CompilerParams(
            dimension_semantics=("parallel", "arbitrary"),
            vmem_limit_bytes=_VMEM_LIMIT),
    )(x, ctx, *args)
    return y, ctx_next


def _final_call(x, ctx, bp_last, params, t_tile):
    B, T, C = x.shape
    V = params["w_vocab"].shape[1]
    nT = T // t_tile
    args = _mlp_args(bp_last) + [params["norm_final_w"],
                                 params["w_vocab"].astype(jnp.bfloat16),
                                 params["b_vocab"]]
    return pl.pallas_call(
        _final_kernel,
        out_shape=jax.ShapeDtypeStruct((B, T, V), jnp.float32),
        grid=(B, nT),
        in_specs=([pl.BlockSpec((1, t_tile, C), lambda b, t: (b, t, 0)),
                   pl.BlockSpec((1, 1, C), lambda b, t: (b, 0, 0))]
                  + [_const_spec(a) for a in args]),
        out_specs=pl.BlockSpec((1, t_tile, V), lambda b, t: (b, t, 0)),
        compiler_params=pltpu.CompilerParams(
            dimension_semantics=("parallel", "parallel"),
            vmem_limit_bytes=_VMEM_LIMIT),
    )(x, ctx, *args)


def deepseek_latent_forward(tokens, params, n_heads, t_tile=None):
    """tokens: (seq_len, batch) int32  ->  logits: (seq_len, batch, vocab)."""
    S, _ = tokens.shape
    # TODO(synk): token/positional embedding gather stays in XLA (data-dependent row
    # gather); everything downstream runs in Pallas kernels.
    x = jnp.take(params["token_emb"], tokens, axis=0) + params["pos_emb"][:S][:, None, :]
    x = jnp.transpose(x, (1, 0, 2))                    # (B, S, C)
    B, T, C = x.shape

    if t_tile is None:
        t_tile = T if T <= 256 else 256                # one tile per batch if it fits
    assert T % t_tile == 0 and C % n_heads == 0

    blocks = [_prepare_block(blk, n_heads, C) for blk in params["blocks"]]

    # Block 0 attention on the embedded activations.
    ctx = _attn_ctx_call(x, blocks[0], t_tile)
    # Fused: MLP of block i + attention of block i+1 (x read once per block).
    for i in range(len(blocks) - 1):
        x, ctx = _fused_call(x, ctx, blocks[i], blocks[i + 1], t_tile)
    # MLP of last block + final RMSNorm + vocab projection.
    logits = _final_call(x, ctx, blocks[-1], params, t_tile)   # (B, S, V)
    return jnp.transpose(logits, (1, 0, 2))                    # (S, B, V)


# --------------------------------------------------------------------------------------
# Pure-JAX f32 reference (mirrors the PyTorch module) for verification
# --------------------------------------------------------------------------------------
def reference(tokens, params, n_heads):
    S, _ = tokens.shape
    x = jnp.take(params["token_emb"], tokens, axis=0) + params["pos_emb"][:S][:, None, :]
    x = jnp.transpose(x, (1, 0, 2))
    C = x.shape[-1]
    hd = C // n_heads

    def rms(v, w):
        n = jnp.sqrt(jnp.mean(v * v, axis=-1, keepdims=True) + EPS)
        return w * (v / n)

    for p in params["blocks"]:
        L = p["q_latents"].shape[0]
        B, T, _ = x.shape
        n1 = rms(x, p["norm1_w"][0])
        kv = n1 @ p["w_kv"] + p["b_kv"][0]
        k, v = kv[..., :C], kv[..., C:]
        k = k.reshape(B, T, n_heads, hd).transpose(0, 2, 1, 3)
        v = v.reshape(B, T, n_heads, hd).transpose(0, 2, 1, 3)
        q = jnp.broadcast_to(p["q_latents"][None], (B, L, C))
        q = q.reshape(B, L, n_heads, hd).transpose(0, 2, 1, 3)
        s = jnp.einsum("bhld,bhtd->bhlt", q, k) / math.sqrt(hd)
        pr = jax.nn.softmax(s, axis=-1)
        o = jnp.einsum("bhlt,bhtd->bhld", pr, v)
        o = o.transpose(0, 2, 1, 3).reshape(B, L, C)
        latents = o @ p["w_out"] + p["b_out"][0]
        ctx = jnp.mean(latents, axis=1, keepdims=True)
        x = x + ctx
        n2 = rms(x, p["norm2_w"][0])
        h1 = jax.nn.gelu(n2 @ p["w_mlp1"] + p["b_mlp1"][0], approximate=True)
        x = x + h1 @ p["w_mlp2"] + p["b_mlp2"][0]

    nf = rms(x, params["norm_final_w"][0])
    logits = nf @ params["w_vocab"] + params["b_vocab"][0]
    return jnp.transpose(logits, (1, 0, 2))


# --------------------------------------------------------------------------------------
# Parameter init + test harness
# --------------------------------------------------------------------------------------
def init_params(key, vocab_size, d_model, block_size, num_blocks, n_latents):
    keys = jax.random.split(key, 3 + num_blocks)
    f32 = jnp.float32

    def block_params(k):
        ks = jax.random.split(k, 8)
        return {
            "q_latents": jax.random.normal(ks[0], (n_latents, d_model), f32),
            "w_kv": 0.05 * jax.random.normal(ks[1], (d_model, 2 * d_model), f32),
            "b_kv": 0.01 * jax.random.normal(ks[2], (1, 2 * d_model), f32),
            "w_out": 0.05 * jax.random.normal(ks[3], (d_model, d_model), f32),
            "b_out": 0.01 * jax.random.normal(ks[4], (1, d_model), f32),
            "norm1_w": jnp.ones((1, d_model), f32),
            "norm2_w": jnp.ones((1, d_model), f32),
            "w_mlp1": 0.05 * jax.random.normal(ks[5], (d_model, 4 * d_model), f32),
            "b_mlp1": 0.01 * jax.random.normal(ks[6], (1, 4 * d_model), f32),
            "w_mlp2": 0.05 * jax.random.normal(ks[7], (4 * d_model, d_model), f32),
            "b_mlp2": jnp.zeros((1, d_model), f32),
        }

    return {
        "token_emb": jax.random.normal(keys[0], (vocab_size, d_model), f32),
        "pos_emb": jax.random.normal(keys[1], (block_size, d_model), f32),
        "blocks": [block_params(keys[3 + i]) for i in range(num_blocks)],
        "norm_final_w": jnp.ones((1, d_model), f32),
        "w_vocab": 0.05 * jax.random.normal(keys[2], (d_model, vocab_size), f32),
        "b_vocab": jnp.zeros((1, vocab_size), f32),
    }


if __name__ == "__main__":
    VOCAB = 256          # lane-dense vocab projection
    D_MODEL = 128        # C % 128 == 0
    BLOCK_SIZE = 32
    NUM_BLOCKS = 2
    N_HEADS = 4          # head_dim = 32
    N_LATENTS = 4
    SEQ, BATCH = 32, 2   # one T tile per batch (t_tile = T = 32)

    key = jax.random.PRNGKey(0)
    kt, kp = jax.random.split(key)
    tokens = jax.random.randint(kt, (SEQ, BATCH), 0, VOCAB, dtype=jnp.int32)
    params = init_params(kp, VOCAB, D_MODEL, BLOCK_SIZE, NUM_BLOCKS, N_LATENTS)

    logits = deepseek_latent_forward(tokens, params, N_HEADS)
    logits = jax.block_until_ready(logits)

    ref = reference(tokens, params, N_HEADS)
    assert logits.shape == (SEQ, BATCH, VOCAB)
    max_err = float(jnp.max(jnp.abs(logits - ref)))
    # bf16 matmul operands (f32 accumulation) vs f32 reference -> loosen tolerance.
    assert jnp.allclose(logits, ref, atol=5e-2, rtol=5e-2), max_err
    print("KERNEL_OK")
</pallas_src>

<mosaic_0001>
module attributes {stable_mosaic.version = 11 : i64} {
  func.func @_attn_ctx_kernel(%arg0: i32, %arg1: i32, %arg2: memref<1x32x128xf32, #tpu.memory_space<vmem>>, %arg3: memref<16x128xbf16, #tpu.memory_space<vmem>>, %arg4: memref<16x128xf32, #tpu.memory_space<vmem>>, %arg5: memref<1x128xf32, #tpu.memory_space<vmem>>, %arg6: memref<128x256xbf16, #tpu.memory_space<vmem>>, %arg7: memref<1x256xf32, #tpu.memory_space<vmem>>, %arg8: memref<128x128xbf16, #tpu.memory_space<vmem>>, %arg9: memref<1x128xf32, #tpu.memory_space<vmem>>, %arg10: memref<1x1x128xf32, #tpu.memory_space<vmem>>, %arg11: memref<16x1xf32, #tpu.memory_space<vmem>>, %arg12: memref<16x1xf32, #tpu.memory_space<vmem>>, %arg13: memref<16x128xf32, #tpu.memory_space<vmem>>) attributes {dimension_semantics = [#tpu.dimension_semantics<parallel>, #tpu.dimension_semantics<arbitrary>], iteration_bounds = array<i64: 2, 1>, scalar_prefetch = 0 : i64, scratch_operands = 3 : i64, tpu.core_type = #tpu.core_type<tc>, window_params = [{transform_indices = @transform_0, window_bounds = array<i64: 1, 32, 128>}, {pipeline_mode = #tpu.pipeline_mode<synchronous>, transform_indices = @transform_1, window_bounds = array<i64: 16, 128>}, {pipeline_mode = #tpu.pipeline_mode<synchronous>, transform_indices = @transform_2, window_bounds = array<i64: 16, 128>}, {pipeline_mode = #tpu.pipeline_mode<synchronous>, transform_indices = @transform_3, window_bounds = array<i64: 1, 128>}, {pipeline_mode = #tpu.pipeline_mode<synchronous>, transform_indices = @transform_4, window_bounds = array<i64: 128, 256>}, {pipeline_mode = #tpu.pipeline_mode<synchronous>, transform_indices = @transform_5, window_bounds = array<i64: 1, 256>}, {pipeline_mode = #tpu.pipeline_mode<synchronous>, transform_indices = @transform_6, window_bounds = array<i64: 128, 128>}, {pipeline_mode = #tpu.pipeline_mode<synchronous>, transform_indices = @transform_7, window_bounds = array<i64: 1, 128>}, {transform_indices = @transform_8, window_bounds = array<i64: 1, 1, 128>}]} {
    %c0_i32 = arith.constant 0 : i32
    %0 = arith.cmpi eq, %arg1, %c0_i32 : i32
    %1 = arith.extui %0 : i1 to i32
    %c0_i32_0 = arith.constant 0 : i32
    %2 = arith.cmpi ne, %1, %c0_i32_0 : i32
    scf.if %2 {
      %cst_32 = arith.constant 0xFF800000 : f32
      %56 = vector.broadcast %cst_32 : f32 to vector<16x1xf32>
      %c0_33 = arith.constant 0 : index
      %c0_34 = arith.constant 0 : index
      %57 = vector.load %arg11[%c0_33, %c0_34] : memref<16x1xf32, #tpu.memory_space<vmem>>, vector<16x1xf32>
      tpu.vector_store %arg11[%c0_33, %c0_34], %56 {strides = array<i32>} : memref<16x1xf32, #tpu.memory_space<vmem>>, vector<16x1xf32>,
      %cst_35 = arith.constant 0.000000e+00 : f32
      %58 = vector.broadcast %cst_35 : f32 to vector<16x1xf32>
      %c0_36 = arith.constant 0 : index
      %c0_37 = arith.constant 0 : index
      %59 = vector.load %arg12[%c0_36, %c0_37] : memref<16x1xf32, #tpu.memory_space<vmem>>, vector<16x1xf32>
      tpu.vector_store %arg12[%c0_36, %c0_37], %58 {strides = array<i32>} : memref<16x1xf32, #tpu.memory_space<vmem>>, vector<16x1xf32>,
      %cst_38 = arith.constant 0.000000e+00 : f32
      %60 = vector.broadcast %cst_38 : f32 to vector<16x128xf32>
      %c0_39 = arith.constant 0 : index
      %c0_40 = arith.constant 0 : index
      %61 = vector.load %arg13[%c0_39, %c0_40] : memref<16x128xf32, #tpu.memory_space<vmem>>, vector<16x128xf32>
      tpu.vector_store %arg13[%c0_39, %c0_40], %60 {strides = array<i32>} : memref<16x128xf32, #tpu.memory_space<vmem>>, vector<16x128xf32>,
    } else {
    }
    %c0 = arith.constant 0 : index
    %c0_1 = arith.constant 0 : index
    %c0_2 = arith.constant 0 : index
    %3 = vector.load %arg2[%c0, %c0_1, %c0_2] : memref<1x32x128xf32, #tpu.memory_space<vmem>>, vector<1x32x128xf32>
    %4 = vector.shape_cast %3 : vector<1x32x128xf32> to vector<32x128xf32>
    %c0_3 = arith.constant 0 : index
    %c0_4 = arith.constant 0 : index
    %5 = vector.load %arg5[%c0_3, %c0_4] : memref<1x128xf32, #tpu.memory_space<vmem>>, vector<1x128xf32>
    %6 = arith.mulf %4, %4 : vector<32x128xf32>
    %cst = arith.constant dense<0.000000e+00> : vector<32xf32>
    %7 = vector.multi_reduction <add>, %6, %cst [1] : vector<32x128xf32> to vector<32xf32>
    %8 = vector.shape_cast %7 : vector<32xf32> to vector<32x1xf32>
    %cst_5 = arith.constant 1.280000e+02 : f32
    %9 = vector.broadcast %cst_5 : f32 to vector<32x1xf32>
    %10 = arith.divf %8, %9 : vector<32x1xf32>
    %cst_6 = arith.constant 9.99999974E-6 : f32
    %11 = vector.broadcast %cst_6 : f32 to vector<32x1xf32>
    %12 = arith.addf %10, %11 : vector<32x1xf32>
    %13 = math.rsqrt %12 : vector<32x1xf32>
    %14 = vector.broadcast %13 : vector<32x1xf32> to vector<32x128xf32>
    %15 = arith.mulf %4, %14 : vector<32x128xf32>
    %16 = vector.broadcast %5 : vector<1x128xf32> to vector<32x128xf32>
    %17 = arith.mulf %15, %16 : vector<32x128xf32>
    %18 = arith.truncf %17 : vector<32x128xf32> to vector<32x128xbf16>
    %c0_7 = arith.constant 0 : index
    %c0_8 = arith.constant 0 : index
    %19 = vector.load %arg6[%c0_7, %c0_8] : memref<128x256xbf16, #tpu.memory_space<vmem>>, vector<128x256xbf16>
    %cst_9 = arith.constant dense<0.000000e+00> : vector<32x256xf32>
    %20 = tpu.matmul %18, %19, %cst_9 {dimension_numbers = #tpu.dot_dimension_numbers<[1], [0], [0], [1], [0, 0, 1, 1], [], []>} : vector<32x128xbf16>, vector<128x256xbf16>, vector<32x256xf32> -> vector<32x256xf32>
    %c0_10 = arith.constant 0 : index
    %c0_11 = arith.constant 0 : index
    %21 = vector.load %arg7[%c0_10, %c0_11] : memref<1x256xf32, #tpu.memory_space<vmem>>, vector<1x256xf32>
    %22 = vector.broadcast %21 : vector<1x256xf32> to vector<32x256xf32>
    %23 = arith.addf %20, %22 : vector<32x256xf32>
    %24 = vector.extract_strided_slice %23 {offsets = [0, 0], sizes = [32, 128], strides = [1, 1]} : vector<32x256xf32> to vector<32x128xf32>
    %25 = arith.truncf %24 : vector<32x128xf32> to vector<32x128xbf16>
    %26 = vector.extract_strided_slice %23 {offsets = [0, 128], sizes = [32, 128], strides = [1, 1]} : vector<32x256xf32> to vector<32x128xf32>
    %27 = arith.truncf %26 : vector<32x128xf32> to vector<32x128xbf16>
    %c0_12 = arith.constant 0 : index
    %c0_13 = arith.constant 0 : index
    %28 = vector.load %arg3[%c0_12, %c0_13] : memref<16x128xbf16, #tpu.memory_space<vmem>>, vector<16x128xbf16>
    "tpu.trace_start"() <{level = 10 : i32, message = "lc,tc->lt"}> : () -> ()
    %cst_14 = arith.constant dense<0.000000e+00> : vector<16x32xf32>
    %29 = tpu.matmul %28, %25, %cst_14 {dimension_numbers = #tpu.dot_dimension_numbers<[1], [1], [0], [0], [0, 0, 1, 0], [], []>} : vector<16x128xbf16>, vector<32x128xbf16>, vector<16x32xf32> -> vector<16x32xf32>
    "tpu.trace_stop"() : () -> ()
    %c0_15 = arith.constant 0 : index
    %c0_16 = arith.constant 0 : index
    %30 = vector.load %arg11[%c0_15, %c0_16] : memref<16x1xf32, #tpu.memory_space<vmem>>, vector<16x1xf32>
    %cst_17 = arith.constant dense<0xFF800000> : vector<16xf32>
    %31 = vector.multi_reduction <maximumf>, %29, %cst_17 [1] : vector<16x32xf32> to vector<16xf32>
    %32 = vector.shape_cast %31 : vector<16xf32> to vector<16x1xf32>
    %33 = arith.maximumf %30, %32 : vector<16x1xf32>
    %34 = arith.subf %30, %33 : vector<16x1xf32>
    %35 = math.exp %34 : vector<16x1xf32>
    %36 = vector.broadcast %33 : vector<16x1xf32> to vector<16x32xf32>
    %37 = arith.subf %29, %36 : vector<16x32xf32>
    %38 = math.exp %37 : vector<16x32xf32>
    %c0_18 = arith.constant 0 : index
    %c0_19 = arith.constant 0 : index
    %39 = vector.load %arg12[%c0_18, %c0_19] : memref<16x1xf32, #tpu.memory_space<vmem>>, vector<16x1xf32>
    %40 = arith.mulf %35, %39 : vector<16x1xf32>
    %cst_20 = arith.constant dense<0.000000e+00> : vector<16xf32>
    %41 = vector.multi_reduction <add>, %38, %cst_20 [1] : vector<16x32xf32> to vector<16xf32>
    %42 = vector.shape_cast %41 : vector<16xf32> to vector<16x1xf32>
    %43 = arith.addf %40, %42 : vector<16x1xf32>
    %c0_21 = arith.constant 0 : index
    %c0_22 = arith.constant 0 : index
    %44 = vector.load %arg12[%c0_21, %c0_22] : memref<16x1xf32, #tpu.memory_space<vmem>>, vector<16x1xf32>
    tpu.vector_store %arg12[%c0_21, %c0_22], %43 {strides = array<i32>} : memref<16x1xf32, #tpu.memory_space<vmem>>, vector<16x1xf32>,
    %c0_23 = arith.constant 0 : index
    %c0_24 = arith.constant 0 : index
    %45 = vector.load %arg13[%c0_23, %c0_24] : memref<16x128xf32, #tpu.memory_space<vmem>>, vector<16x128xf32>
    %46 = vector.broadcast %35 : vector<16x1xf32> to vector<16x128xf32>
    %47 = arith.mulf %46, %45 : vector<16x128xf32>
    %48 = arith.truncf %38 : vector<16x32xf32> to vector<16x32xbf16>
    %cst_25 = arith.constant dense<0.000000e+00> : vector<16x128xf32>
    %49 = tpu.matmul %48, %27, %cst_25 {dimension_numbers = #tpu.dot_dimension_numbers<[1], [0], [0], [1], [0, 0, 1, 1], [], []>} : vector<16x32xbf16>, vector<32x128xbf16>, vector<16x128xf32> -> vector<16x128xf32>
    %50 = arith.addf %47, %49 : vector<16x128xf32>
    %c0_26 = arith.constant 0 : index
    %c0_27 = arith.constant 0 : index
    %51 = vector.load %arg13[%c0_26, %c0_27] : memref<16x128xf32, #tpu.memory_space<vmem>>, vector<16x128xf32>
    tpu.vector_store %arg13[%c0_26, %c0_27], %50 {strides = array<i32>} : memref<16x128xf32, #tpu.memory_space<vmem>>, vector<16x128xf32>,
    %c0_28 = arith.constant 0 : index
    %c0_29 = arith.constant 0 : index
    %52 = vector.load %arg11[%c0_28, %c0_29] : memref<16x1xf32, #tpu.memory_space<vmem>>, vector<16x1xf32>
    tpu.vector_store %arg11[%c0_28, %c0_29], %33 {strides = array<i32>} : memref<16x1xf32, #tpu.memory_space<vmem>>, vector<16x1xf32>,
    %c0_i32_30 = arith.constant 0 : i32
    %53 = arith.cmpi eq, %arg1, %c0_i32_30 : i32
    %54 = arith.extui %53 : i1 to i32
    %c0_i32_31 = arith.constant 0 : i32
    %55 = arith.cmpi ne, %54, %c0_i32_31 : i32
    scf.if %55 {
      %c0_32 = arith.constant 0 : index
      %c0_33 = arith.constant 0 : index
      %56 = vector.load %arg13[%c0_32, %c0_33] : memref<16x128xf32, #tpu.memory_space<vmem>>, vector<16x128xf32>
      %c0_34 = arith.constant 0 : index
      %c0_35 = arith.constant 0 : index
      %57 = vector.load %arg12[%c0_34, %c0_35] : memref<16x1xf32, #tpu.memory_space<vmem>>, vector<16x1xf32>
      %58 = vector.broadcast %57 : vector<16x1xf32> to vector<16x128xf32>
      %59 = arith.divf %56, %58 : vector<16x128xf32>
      %c0_36 = arith.constant 0 : index
      %c0_37 = arith.constant 0 : index
      %60 = vector.load %arg4[%c0_36, %c0_37] : memref<16x128xf32, #tpu.memory_space<vmem>>, vector<16x128xf32>
      %61 = arith.mulf %59, %60 : vector<16x128xf32>
      %cst_38 = arith.constant dense<0.000000e+00> : vector<128xf32>
      %62 = vector.multi_reduction <add>, %61, %cst_38 [0] : vector<16x128xf32> to vector<128xf32>
      %63 = vector.shape_cast %62 : vector<128xf32> to vector<1x128xf32>
      %64 = arith.truncf %63 : vector<1x128xf32> to vector<1x128xbf16>
      %c0_39 = arith.constant 0 : index
      %c0_40 = arith.constant 0 : index
      %65 = vector.load %arg8[%c0_39, %c0_40] : memref<128x128xbf16, #tpu.memory_space<vmem>>, vector<128x128xbf16>
      %cst_41 = arith.constant dense<0.000000e+00> : vector<1x128xf32>
      %66 = tpu.matmul %64, %65, %cst_41 {dimension_numbers = #tpu.dot_dimension_numbers<[1], [0], [0], [1], [0, 0, 1, 1], [], []>} : vector<1x128xbf16>, vector<128x128xbf16>, vector<1x128xf32> -> vector<1x128xf32>
      %c0_42 = arith.constant 0 : index
      %c0_43 = arith.constant 0 : index
      %67 = vector.load %arg9[%c0_42, %c0_43] : memref<1x128xf32, #tpu.memory_space<vmem>>, vector<1x128xf32>
      %68 = arith.addf %66, %67 : vector<1x128xf32>
      %c0_44 = arith.constant 0 : index
      %c0_45 = arith.constant 0 : index
      %c0_46 = arith.constant 0 : index
      %69 = vector.load %arg10[%c0_44, %c0_45, %c0_46] : memref<1x1x128xf32, #tpu.memory_space<vmem>>, vector<1x1x128xf32>
      %70 = vector.shape_cast %69 : vector<1x1x128xf32> to vector<1x128xf32>
      %71 = vector.shape_cast %68 : vector<1x128xf32> to vector<1x1x128xf32>
      tpu.vector_store %arg10[%c0_44, %c0_45, %c0_46], %71 {strides = array<i32>} : memref<1x1x128xf32, #tpu.memory_space<vmem>>, vector<1x1x128xf32>,
    } else {
    }
    return
  }
  func.func @transform_0(%arg0: i32, %arg1: i32) -> (i32, i32, i32) {
    %c0_i32 = arith.constant 0 : i32
    %c0_i32_0 = arith.constant 0 : i32
    return %arg0, %arg1, %c0_i32 : i32, i32, i32
  }
  func.func @transform_1(%arg0: i32, %arg1: i32) -> (i32, i32) {
    %c0_i32 = arith.constant 0 : i32
    %c0_i32_0 = arith.constant 0 : i32
    %c0_i32_1 = arith.constant 0 : i32
    return %c0_i32, %c0_i32_0 : i32, i32
  }
  func.func @transform_2(%arg0: i32, %arg1: i32) -> (i32, i32) {
    %c0_i32 = arith.constant 0 : i32
    %c0_i32_0 = arith.constant 0 : i32
    %c0_i32_1 = arith.constant 0 : i32
    return %c0_i32, %c0_i32_0 : i32, i32
  }
  func.func @transform_3(%arg0: i32, %arg1: i32) -> (i32, i32) {
    %c0_i32 = arith.constant 0 : i32
    %c0_i32_0 = arith.constant 0 : i32
    %c0_i32_1 = arith.constant 0 : i32
    return %c0_i32, %c0_i32_0 : i32, i32
  }
  func.func @transform_4(%arg0: i32, %arg1: i32) -> (i32, i32) {
    %c0_i32 = arith.constant 0 : i32
    %c0_i32_0 = arith.constant 0 : i32
    %c0_i32_1 = arith.constant 0 : i32
    return %c0_i32, %c0_i32_0 : i32, i32
  }
  func.func @transform_5(%arg0: i32, %arg1: i32) -> (i32, i32) {
    %c0_i32 = arith.constant 0 : i32
    %c0_i32_0 = arith.constant 0 : i32
    %c0_i32_1 = arith.constant 0 : i32
    return %c0_i32, %c0_i32_0 : i32, i32
  }
  func.func @transform_6(%arg0: i32, %arg1: i32) -> (i32, i32) {
    %c0_i32 = arith.constant 0 : i32
    %c0_i32_0 = arith.constant 0 : i32
    %c0_i32_1 = arith.constant 0 : i32
    return %c0_i32, %c0_i32_0 : i32, i32
  }
  func.func @transform_7(%arg0: i32, %arg1: i32) -> (i32, i32) {
    %c0_i32 = arith.constant 0 : i32
    %c0_i32_0 = arith.constant 0 : i32
    %c0_i32_1 = arith.constant 0 : i32
    return %c0_i32, %c0_i32_0 : i32, i32
  }
  func.func @transform_8(%arg0: i32, %arg1: i32) -> (i32, i32, i32) {
    %c0_i32 = arith.constant 0 : i32
    %c0_i32_0 = arith.constant 0 : i32
    %c0_i32_1 = arith.constant 0 : i32
    return %arg0, %c0_i32, %c0_i32_0 : i32, i32, i32
  }
}

</mosaic_0001>

<llo_original>
// kernel: tpu_custom_call.1
$region0: #{tpu_custom_call.1}
  #allocation0 [shape = 'u32[]', space=smem, size = 0x4, offset = 0x4, fixed_abs, tag = 'smem constant byte address 0x4 - core index']
  #allocation1 [shape = 'u32[144,128]{1,0:T(1,128)}', space=vmem, size = 0x12000, scoped, tag = 'internal scratch']
  #allocation2 [shape = 'f32[16,1]{1,0:T(8,128)}', space=vmem, size = 0x2000, scoped, tag = 'scratch operand']
  #allocation3 [shape = 'f32[16,1]{1,0:T(8,128)}', space=vmem, size = 0x2000, scoped, tag = 'scratch operand']
  #allocation4 [shape = 'f32[16,128]{1,0:T(8,128)}', space=vmem, size = 0x2000, scoped, tag = 'scratch operand']
  %s0 = inlined_call_operand.hbm [shape: f32[2,32,128], index: 0, kind: input, shape index: {}]
  %s1 = inlined_call_operand.hbm [shape: bf16[16,128], index: 1, kind: input, shape index: {}]
  %s2 = inlined_call_operand.hbm [shape: f32[16,128], index: 2, kind: input, shape index: {}]
  %s3 = inlined_call_operand.vmem [shape: f32[1,128], index: 3, kind: input, shape index: {}]
  %s4 = inlined_call_operand.hbm [shape: bf16[128,256], index: 4, kind: input, shape index: {}]
  %s5 = inlined_call_operand.vmem [shape: f32[1,256], index: 5, kind: input, shape index: {}]
  %s6 = inlined_call_operand.hbm [shape: bf16[128,128], index: 6, kind: input, shape index: {}]
  %s7 = inlined_call_operand.vmem [shape: f32[1,128], index: 7, kind: input, shape index: {}]
  %s8 = inlined_call_operand.hbm [shape: f32[2,1,128], index: 8, kind: output, shape index: {}]
  %s9 = sld [smem:[#allocation0]]
  $region93: #{tpu_custom_call.1} parent=0
    _
  %s11 = ssub.s32 1, %s9
  %s12 = scalar_select 0, %s11, %s9
  $region1: #{tpu_custom_call.1} parent=0
    #allocation5 [shape = 'u8[32768]{0}', space=vmem, size = 0x8000, scoped, tag = 'input window, operand 0']
    #allocation6 [shape = 's32[2]{0}', space=sflag, size = 0x8, scoped, tag = 'scoped memory for tpu_custom_call.1']
    #allocation7 [shape = 's32[2]{0}', space=sflag, size = 0x8, scoped, tag = 'scoped memory for tpu_custom_call.1']
    #allocation8 [shape = 'u8[4096]{0}', space=vmem, size = 0x1000, scoped, tag = 'input window, operand 1, single buffered']
    #allocation9 [shape = 's32[1]{0}', space=sflag, size = 0x4, scoped, tag = 'scoped memory for tpu_custom_call.1']
    #allocation10 [shape = 'u8[8192]{0}', space=vmem, size = 0x2000, scoped, tag = 'input window, operand 2, single buffered']
    #allocation11 [shape = 'u8[65536]{0}', space=vmem, size = 0x10000, scoped, tag = 'input window, operand 4, single buffered']
    #allocation12 [shape = 's32[1]{0}', space=sflag, size = 0x4, scoped, tag = 'scoped memory for tpu_custom_call.1']
    #allocation13 [shape = 'u8[32768]{0}', space=vmem, size = 0x8000, scoped, tag = 'input window, operand 6, single buffered']
    #allocation14 [shape = 'u8[1024]{0}', space=vmem, size = 0x400, scoped, tag = 'output window, operand 0']
    %13 = vsyncpa [#allocation6], 0
    %s14 = scalar_lea.sflag [#allocation6], 1
    %15 = vsyncpa %s14, 0
    %16 = vsyncpa [#allocation9], 0
    %17 = vsyncpa [#allocation12], 0
    %18 = vsyncpa [#allocation7], 0
    %s19 = scalar_lea.sflag [#allocation7], 1
    %20 = vsyncpa %s19, 0
    loop: start=0, step=1, limit=4
    $region2: #{tpu_custom_call.1} parent=1 // loop_pre_header
      _
    $region3: #{tpu_custom_call.1} parent=1 // loop_header
      %s22 = sphi 0, %s26
      %p23 = scmp.ge.s32.totalorder %s22, 4
      %s29 = sphi 0, %s41
      %s30 = sphi 0, %s37
      %s31 = sphi 0, %s29
      %s32 = sphi 0, %s30
      %s33 = sphi 0, %s31
      %s34 = sphi 0, %s32
      %s46 = sphi 0, %s48
      %s49 = sphi 0, %s46
      %s50 = sphi 0, %s49
      %s66 = sphi 0, %s50
      %s70 = sphi 0, %s70
      %s72 = sphi 0, %s70
      %s73 = sphi 0, %s72
      %s87 = sphi 0, %s73
      %s91 = sphi 0, %s91
      %s93 = sphi 0, %s91
      %s94 = sphi 0, %s93
      %s108 = sphi 0, %s94
      %s112 = sphi 0, %s112
      %s114 = sphi 0, %s112
      %s115 = sphi 0, %s114
      %s129 = sphi 0, %s115
      %s133 = sphi 0, %s133
      %s135 = sphi 0, %s133
      %s136 = sphi 0, %s135
      %s150 = sphi 0, %s136
      %s154 = sphi 0, %s154
      %s156 = sphi 0, %s154
      %s157 = sphi 0, %s156
      %s171 = sphi 0, %s157
      %s175 = sphi 0, %s175
      %s177 = sphi 0, %s175
      %s178 = sphi 0, %s177
      %s192 = sphi 0, %s178
      %s196 = sphi 0, %s196
      %s198 = sphi 0, %s196
      %s199 = sphi 0, %s198
      %s213 = sphi 0, %s199
      %s219 = sphi 0, %s221
      %s222 = sphi 0, %s219
      %s223 = sphi 0, %s222
      %s239 = sphi 0, %s223
    $region4: #{tpu_custom_call.1} parent=1 // loop_header_branch
      %25 = sbr.rel (%p23) target = $region8
    $region5: #{tpu_custom_call.1} parent=1 // loop_body
      %s27 = ssub.s32 %s22, 1
      %s28 = ssub.s32 %s22, 2
      %s35 = sadd.s32 1, %s30
      %p36 = scmp.ge.s32.totalorder %s35, 1
      %s37 = scalar_select %p36, 0, %s35
      %s38 = sadd.s32 1, %s29
      %s39 = scalar_select %p36, %s38, %s29
      %p40 = scmp.ge.s32.totalorder %s39, 2
      %s41 = scalar_select %p40, 0, %s39
      %s42 = ssub.s32 %s29, %s41
      %s43 = ssub.s32 %s30, %s37
      %s44 = sor.u32 %s42, %s43
      %p45 = scmp.eq.s32.totalorder %s44, 0
      %s47 = sadd.s32 %s46, 1
      %s48 = scalar_select %p45, %s46, %s47
      %p51 = pneg %p45
      %p52 = scmp.eq.s32.totalorder %s22, 1
      %p53 = por %p51, %p52
      %p54 = scmp.ne.s32.totalorder %s46, %s49
      %p55 = scmp.eq.s32.totalorder %s22, 0
      %p56 = por %p54, %p55
      %p57 = scmp.ne.s32.totalorder %s46, %s49
      %p58 = scmp.eq.s32.totalorder %s27, 1
      %p59 = por %p57, %p58
      %p60 = scmp.ne.s32.totalorder %s49, %s50
      %p61 = scmp.eq.s32.totalorder %s27, 0
      %p62 = por %p60, %p61
      %p63 = scmp.ne.s32.totalorder %s49, %s50
      %p64 = scmp.eq.s32.totalorder %s28, 1
      %p65 = por %p63, %p64
      %p67 = scmp.ne.s32.totalorder %s50, %s66
      %p68 = scmp.eq.s32.totalorder %s28, 0
      %p69 = por %p67, %p68
      %s71 = sadd.s32 %s70, 1
      %p74 = scmp.eq.s32.totalorder %s22, 1
      %p75 = scmp.ne.s32.totalorder %s70, %s72
      %p76 = scmp.eq.s32.totalorder %s22, 0
      %p77 = por %p75, %p76
      %p78 = scmp.ne.s32.totalorder %s70, %s72
      %p79 = scmp.eq.s32.totalorder %s27, 1
      %p80 = por %p78, %p79
      %p81 = scmp.ne.s32.totalorder %s72, %s73
      %p82 = scmp.eq.s32.totalorder %s27, 0
      %p83 = por %p81, %p82
      %p84 = scmp.ne.s32.totalorder %s72, %s73
      %p85 = scmp.eq.s32.totalorder %s28, 1
      %p86 = por %p84, %p85
      %p88 = scmp.ne.s32.totalorder %s73, %s87
      %p89 = scmp.eq.s32.totalorder %s28, 0
      %p90 = por %p88, %p89
      %s92 = sadd.s32 %s91, 1
      %p95 = scmp.eq.s32.totalorder %s22, 1
      %p96 = scmp.ne.s32.totalorder %s91, %s93
      %p97 = scmp.eq.s32.totalorder %s22, 0
      %p98 = por %p96, %p97
      %p99 = scmp.ne.s32.totalorder %s91, %s93
      %p100 = scmp.eq.s32.totalorder %s27, 1
      %p101 = por %p99, %p100
      %p102 = scmp.ne.s32.totalorder %s93, %s94
      %p103 = scmp.eq.s32.totalorder %s27, 0
      %p104 = por %p102, %p103
      %p105 = scmp.ne.s32.totalorder %s93, %s94
      %p106 = scmp.eq.s32.totalorder %s28, 1
      %p107 = por %p105, %p106
      %p109 = scmp.ne.s32.totalorder %s94, %s108
      %p110 = scmp.eq.s32.totalorder %s28, 0
      %p111 = por %p109, %p110
      %s113 = sadd.s32 %s112, 1
      %p116 = scmp.eq.s32.totalorder %s22, 1
      %p117 = scmp.ne.s32.totalorder %s112, %s114
      %p118 = scmp.eq.s32.totalorder %s22, 0
      %p119 = por %p117, %p118
      %p120 = scmp.ne.s32.totalorder %s112, %s114
      %p121 = scmp.eq.s32.totalorder %s27, 1
      %p122 = por %p120, %p121
      %p123 = scmp.ne.s32.totalorder %s114, %s115
      %p124 = scmp.eq.s32.totalorder %s27, 0
      %p125 = por %p123, %p124
      %p126 = scmp.ne.s32.totalorder %s114, %s115
      %p127 = scmp.eq.s32.totalorder %s28, 1
      %p128 = por %p126, %p127
      %p130 = scmp.ne.s32.totalorder %s115, %s129
      %p131 = scmp.eq.s32.totalorder %s28, 0
      %p132 = por %p130, %p131
      %s134 = sadd.s32 %s133, 1
      %p137 = scmp.eq.s32.totalorder %s22, 1
      %p138 = scmp.ne.s32.totalorder %s133, %s135
      %p139 = scmp.eq.s32.totalorder %s22, 0
      %p140 = por %p138, %p139
      %p141 = scmp.ne.s32.totalorder %s133, %s135
      %p142 = scmp.eq.s32.totalorder %s27, 1
      %p143 = por %p141, %p142
      %p144 = scmp.ne.s32.totalorder %s135, %s136
      %p145 = scmp.eq.s32.totalorder %s27, 0
      %p146 = por %p144, %p145
      %p147 = scmp.ne.s32.totalorder %s135, %s136
      %p148 = scmp.eq.s32.totalorder %s28, 1
      %p149 = por %p147, %p148
      %p151 = scmp.ne.s32.totalorder %s136, %s150
      %p152 = scmp.eq.s32.totalorder %s28, 0
      %p153 = por %p151, %p152
      %s155 = sadd.s32 %s154, 1
      %p158 = scmp.eq.s32.totalorder %s22, 1
      %p159 = scmp.ne.s32.totalorder %s154, %s156
      %p160 = scmp.eq.s32.totalorder %s22, 0
      %p161 = por %p159, %p160
      %p162 = scmp.ne.s32.totalorder %s154, %s156
      %p163 = scmp.eq.s32.totalorder %s27, 1
      %p164 = por %p162, %p163
      %p165 = scmp.ne.s32.totalorder %s156, %s157
      %p166 = scmp.eq.s32.totalorder %s27, 0
      %p167 = por %p165, %p166
      %p168 = scmp.ne.s32.totalorder %s156, %s157
      %p169 = scmp.eq.s32.totalorder %s28, 1
      %p170 = por %p168, %p169
      %p172 = scmp.ne.s32.totalorder %s157, %s171
      %p173 = scmp.eq.s32.totalorder %s28, 0
      %p174 = por %p172, %p173
      %s176 = sadd.s32 %s175, 1
      %p179 = scmp.eq.s32.totalorder %s22, 1
      %p180 = scmp.ne.s32.totalorder %s175, %s177
      %p181 = scmp.eq.s32.totalorder %s22, 0
      %p182 = por %p180, %p181
      %p183 = scmp.ne.s32.totalorder %s175, %s177
      %p184 = scmp.eq.s32.totalorder %s27, 1
      %p185 = por %p183, %p184
      %p186 = scmp.ne.s32.totalorder %s177, %s178
      %p187 = scmp.eq.s32.totalorder %s27, 0
      %p188 = por %p186, %p187
      %p189 = scmp.ne.s32.totalorder %s177, %s178
      %p190 = scmp.eq.s32.totalorder %s28, 1
      %p191 = por %p189, %p190
      %p193 = scmp.ne.s32.totalorder %s178, %s192
      %p194 = scmp.eq.s32.totalorder %s28, 0
      %p195 = por %p193, %p194
      %s197 = sadd.s32 %s196, 1
      %p200 = scmp.eq.s32.totalorder %s22, 1
      %p201 = scmp.ne.s32.totalorder %s196, %s198
      %p202 = scmp.eq.s32.totalorder %s22, 0
      %p203 = por %p201, %p202
      %p204 = scmp.ne.s32.totalorder %s196, %s198
      %p205 = scmp.eq.s32.totalorder %s27, 1
      %p206 = por %p204, %p205
      %p207 = scmp.ne.s32.totalorder %s198, %s199
      %p208 = scmp.eq.s32.totalorder %s27, 0
      %p209 = por %p207, %p208
      %p210 = scmp.ne.s32.totalorder %s198, %s199
      %p211 = scmp.eq.s32.totalorder %s28, 1
      %p212 = por %p210, %p211
      %p214 = scmp.ne.s32.totalorder %s199, %s213
      %p215 = scmp.eq.s32.totalorder %s28, 0
      %p216 = por %p214, %p215
      %s217 = ssub.s32 %s29, %s41
      %p218 = scmp.eq.s32.totalorder %s217, 0
      %s220 = sadd.s32 %s219, 1
      %s221 = scalar_select %p218, %s219, %s220
      %p224 = pneg %p218
      %p225 = scmp.eq.s32.totalorder %s22, 1
      %p226 = por %p224, %p225
      %p227 = scmp.ne.s32.totalorder %s219, %s222
      %p228 = scmp.eq.s32.totalorder %s22, 0
      %p229 = por %p227, %p228
      %p230 = scmp.ne.s32.totalorder %s219, %s222
      %p231 = scmp.eq.s32.totalorder %s27, 1
      %p232 = por %p230, %p231
      %p233 = scmp.ne.s32.totalorder %s222, %s223
      %p234 = scmp.eq.s32.totalorder %s27, 0
      %p235 = por %p233, %p234
      %p236 = scmp.ne.s32.totalorder %s222, %s223
      %p237 = scmp.eq.s32.totalorder %s28, 1
      %p238 = por %p236, %p237
      %p240 = scmp.ne.s32.totalorder %s223, %s239
      %p241 = scmp.eq.s32.totalorder %s28, 0
      %p242 = por %p240, %p241
      %p243 = scmp.le.s32.totalorder 1, %s22
      %p244 = scmp.lt.s32.totalorder %s22, 3
      %p245 = pnand %p243, %p244
      %p246 = pneg %p245
      // Predicated region
      $region9: #{tpu_custom_call.1} parent=5 // pred_check
        _
      $region10: #{tpu_custom_call.1} parent=5 // pred_check_branch
        %248 = sbr.rel (%p245) target = $region12
      $region11: #{tpu_custom_call.1} parent=5 // pred_region
        %s249 = ssub.s32 %s22, 1
        // Predicated region
        $region13: #{tpu_custom_call.1} parent=11 // pred_check
          %p250 = pneg %p83
        $region14: #{tpu_custom_call.1} parent=11 // pred_check_branch
          %252 = sbr.rel (%p250) target = $region16
        $region15: #{tpu_custom_call.1} parent=11 // pred_region
          %s254 = ssub.s32 128, 128
          %255 = vsyncadd [#allocation9], %s254
          %s256 = sshll.u32 [#allocation8], 4
          %s257 = int_to_ptr.vmem [resolvable:$true] %s256
          %262 = dma.hbm_to_vmem [thread:$0]  %s1, 128, %s257, [#allocation9], 64, 64, 4
        $region16: #{tpu_custom_call.1} parent=11 // pred_fallthru
          _
        // Predicated region
        $region17: #{tpu_custom_call.1} parent=11 // pred_check
          %p263 = pneg %p104
        $region18: #{tpu_custom_call.1} parent=11 // pred_check_branch
          %265 = sbr.rel (%p263) target = $region20
        $region19: #{tpu_custom_call.1} parent=11 // pred_region
          %s267 = ssub.s32 256, 256
          %268 = vsyncadd [#allocation9], %s267
          %s269 = sshll.u32 [#allocation10], 4
          %s270 = int_to_ptr.vmem [resolvable:$true] %s269
          %275 = dma.hbm_to_vmem [thread:$0]  %s2, 256, %s270, [#allocation9], 128, 128, 8
        $region20: #{tpu_custom_call.1} parent=11 // pred_fallthru
          _
        // Predicated region
        $region21: #{tpu_custom_call.1} parent=11 // pred_check
          %p276 = pneg %p125
        $region22: #{tpu_custom_call.1} parent=11 // pred_check_branch
          %278 = sbr.rel (%p276) target = $region24
        $region23: #{tpu_custom_call.1} parent=11 // pred_region
          _
        $region24: #{tpu_custom_call.1} parent=11 // pred_fallthru
          _
        // Predicated region
        $region25: #{tpu_custom_call.1} parent=11 // pred_check
          %p279 = pneg %p146
        $region26: #{tpu_custom_call.1} parent=11 // pred_check_branch
          %281 = sbr.rel (%p279) target = $region28
        $region27: #{tpu_custom_call.1} parent=11 // pred_region
          %s283 = ssub.s32 2048, 2048
          %284 = vsyncadd [#allocation12], %s283
          %s285 = sshll.u32 [#allocation11], 4
          %s286 = int_to_ptr.vmem [resolvable:$true] %s285
          %291 = dma.hbm_to_vmem [thread:$0]  %s4, 2048, %s286, [#allocation12], 128, 128, 8
        $region28: #{tpu_custom_call.1} parent=11 // pred_fallthru
          _
        // Predicated region
        $region29: #{tpu_custom_call.1} parent=11 // pred_check
          %p292 = pneg %p167
        $region30: #{tpu_custom_call.1} parent=11 // pred_check_branch
          %294 = sbr.rel (%p292) target = $region32
        $region31: #{tpu_custom_call.1} parent=11 // pred_region
          _
        $region32: #{tpu_custom_call.1} parent=11 // pred_fallthru
          _
        // Predicated region
        $region33: #{tpu_custom_call.1} parent=11 // pred_check
          %p295 = pneg %p188
        $region34: #{tpu_custom_call.1} parent=11 // pred_check_branch
          %297 = sbr.rel (%p295) target = $region36
        $region35: #{tpu_custom_call.1} parent=11 // pred_region
          %s299 = ssub.s32 1024, 1024
          %300 = vsyncadd [#allocation12], %s299
          %s301 = sshll.u32 [#allocation13], 4
          %s302 = int_to_ptr.vmem [resolvable:$true] %s301
          %307 = dma.hbm_to_vmem [thread:$0]  %s6, 1024, %s302, [#allocation12], 64, 64, 4
        $region36: #{tpu_custom_call.1} parent=11 // pred_fallthru
          _
        // Predicated region
        $region37: #{tpu_custom_call.1} parent=11 // pred_check
          %p308 = pneg %p209
        $region38: #{tpu_custom_call.1} parent=11 // pred_check_branch
          %310 = sbr.rel (%p308) target = $region40
        $region39: #{tpu_custom_call.1} parent=11 // pred_region
          _
        $region40: #{tpu_custom_call.1} parent=11 // pred_fallthru
          _
      $region12: #{tpu_custom_call.1} parent=5 // pred_fallthru
        _
      %p311 = scmp.lt.s32.totalorder %s22, 2
      // Predicated region
      $region41: #{tpu_custom_call.1} parent=5 // pred_check
        %p312 = pneg %p311
      $region42: #{tpu_custom_call.1} parent=5 // pred_check_branch
        %314 = sbr.rel (%p312) target = $region44
      $region43: #{tpu_custom_call.1} parent=5 // pred_region
        // Predicated region
        $region45: #{tpu_custom_call.1} parent=43 // pred_check
          %p315 = pneg %p56
        $region46: #{tpu_custom_call.1} parent=43 // pred_check_branch
          %317 = sbr.rel (%p315) target = $region48
        $region47: #{tpu_custom_call.1} parent=43 // pred_region
          %s318 = sand.u32 %s46, 1
          %s319 = scalar_lea.sflag [#allocation6], %s318
          %s320 = sand.u32 %s46, 1
          %s321 = smul.addr %s320, 32
          %s322 = scalar_lea.vmem [#allocation5], %s321
          %s323 = smul.u32 4, %s30
          %s325 = ssub.s32 512, 512
          %326 = vsyncadd %s319, %s325
          %s327 = smul.addr %s29, 4
          %s328 = sadd.s32 %s323, %s327
          %s329 = smul.addr %s328, 128
          %s330 = scalar_lea.hbm %s0, %s329
          %s331 = sshll.u32 %s322, 4
          %s332 = int_to_ptr.vmem [resolvable:$true] %s331
          %337 = dma.hbm_to_vmem [thread:$0]  %s330, 512, %s332, %s319, 128, 128, 8
        $region48: #{tpu_custom_call.1} parent=43 // pred_fallthru
          _
      $region44: #{tpu_custom_call.1} parent=5 // pred_fallthru
        _
      %p338 = scmp.le.s32.totalorder 1, %s22
      %p339 = scmp.lt.s32.totalorder %s22, 3
      %p340 = pnand %p338, %p339
      %p341 = pneg %p340
      // Predicated region
      $region49: #{tpu_custom_call.1} parent=5 // pred_check
        _
      $region50: #{tpu_custom_call.1} parent=5 // pred_check_branch
        %343 = sbr.rel (%p340) target = $region52
      $region51: #{tpu_custom_call.1} parent=5 // pred_region
        %s344 = ssub.s32 %s22, 1
        %s345 = sand.u32 %s49, 1
        %s346 = scalar_lea.sflag [#allocation6], %s345
        %s347 = sand.u32 %s49, 1
        %s348 = smul.addr %s347, 32
        %s349 = scalar_lea.vmem [#allocation5], %s348
        // Predicated region
        $region53: #{tpu_custom_call.1} parent=51 // pred_check
          %p350 = pneg %p62
        $region54: #{tpu_custom_call.1} parent=51 // pred_check_branch
          %352 = sbr.rel (%p350) target = $region56
        $region55: #{tpu_custom_call.1} parent=51 // pred_region
          %353 = dma.done %s346, 512
        $region56: #{tpu_custom_call.1} parent=51 // pred_fallthru
          _
        // Predicated region
        $region57: #{tpu_custom_call.1} parent=51 // pred_check
          %p354 = pneg %p83
        $region58: #{tpu_custom_call.1} parent=51 // pred_check_branch
          %356 = sbr.rel (%p354) target = $region60
        $region59: #{tpu_custom_call.1} parent=51 // pred_region
          %357 = dma.done [#allocation9], 128
        $region60: #{tpu_custom_call.1} parent=51 // pred_fallthru
          _
        // Predicated region
        $region61: #{tpu_custom_call.1} parent=51 // pred_check
          %p358 = pneg %p104
        $region62: #{tpu_custom_call.1} parent=51 // pred_check_branch
          %360 = sbr.rel (%p358) target = $region64
        $region63: #{tpu_custom_call.1} parent=51 // pred_region
          %361 = dma.done [#allocation9], 256
        $region64: #{tpu_custom_call.1} parent=51 // pred_fallthru
          _
        // Predicated region
        $region65: #{tpu_custom_call.1} parent=51 // pred_check
          %p362 = pneg %p146
        $region66: #{tpu_custom_call.1} parent=51 // pred_check_branch
          %364 = sbr.rel (%p362) target = $region68
        $region67: #{tpu_custom_call.1} parent=51 // pred_region
          %365 = dma.done [#allocation12], 2048
        $region68: #{tpu_custom_call.1} parent=51 // pred_fallthru
          _
        // Predicated region
        $region69: #{tpu_custom_call.1} parent=51 // pred_check
          %p366 = pneg %p188
        $region70: #{tpu_custom_call.1} parent=51 // pred_check_branch
          %368 = sbr.rel (%p366) target = $region72
        $region71: #{tpu_custom_call.1} parent=51 // pred_region
          %369 = dma.done [#allocation12], 1024
        $region72: #{tpu_custom_call.1} parent=51 // pred_fallthru
          _
        %s370 = sand.u32 %s49, 1
        %s371 = scalar_lea.sflag [#allocation6], %s370
        %s372 = sand.u32 %s49, 1
        %s373 = smul.addr %s372, 32
        %s374 = scalar_lea.vmem [#allocation5], %s373
        %p375 = pneg %p62
        %p376 = pneg %p59
        %p377 = pneg %p83
        %p378 = pneg %p80
        %p379 = pneg %p104
        %p380 = pneg %p101
        %p381 = pneg %p125
        %p382 = pneg %p122
        %p383 = pneg %p146
        %p384 = pneg %p143
        %p385 = pneg %p167
        %p386 = pneg %p164
        %p387 = pneg %p188
        %p388 = pneg %p185
        %p389 = pneg %p209
        %p390 = pneg %p206
        %p391 = pneg %p235
        %p392 = pneg %p232
        %s393 = sand.u32 %s222, 1
        %s394 = scalar_lea.sflag [#allocation7], %s393
        %s395 = sand.u32 %s222, 1
        %s396 = scalar_lea.vmem [#allocation14], %s395
        %s397 = smul.u32 4, %s32
        %p399 = scmp.eq.s32.totalorder %s32, 0
        // Predicated region
        $region73: #{tpu_custom_call.1} parent=51 // pred_check
          %p400 = pneg %p399
        $region74: #{tpu_custom_call.1} parent=51 // pred_check_branch
          %402 = sbr.rel (%p400) target = $region76
        $region75: #{tpu_custom_call.1} parent=51 // pred_region
          %vm403 = vcmask 7168
          %404 = vst.msk [vmem:[#allocation2] sm:$0xff] %vm403, -inf
          %405 = vst.msk [vmem:[#allocation2 + $0x8] sm:$0xff] %vm403, -inf
          %406 = vst.msk [vmem:[#allocation3] sm:$0xff] %vm403, 0.0
          %407 = vst.msk [vmem:[#allocation3 + $0x8] sm:$0xff] %vm403, 0.0
          %408 = vst [vmem:[#allocation4] sm:$0xff] 0.0
          %409 = vst [vmem:[#allocation4 + $0x8] sm:$0xff] 0.0
        $region76: #{tpu_custom_call.1} parent=51 // pred_fallthru
          _
        %v410 = vld [vmem:[%s349] sm:$0xff]
        %v411 = vld [vmem:[%s349 + $0x8] sm:$0xff]
        %v412 = vld [vmem:[%s349 + $0x10] sm:$0xff]
        %v413 = vld [vmem:[%s349 + $0x18] sm:$0xff]
        %v414 = vld [vmem:[%s3] sm:$0x1]
        %v415 = vmul.f32 %v410, %v410
        %v416 = vmul.f32 %v411, %v411
        %v417 = vmul.f32 %v412, %v412
        %v418 = vmul.f32 %v413, %v413
        %419 = vadd.xlane.f32.xlu0 %v415
        %v420 = vpop.xlane.xlu0 %419
        %421 = vadd.xlane.f32.xlu0 %v416
        %v422 = vpop.xlane.xlu0 %421
        %423 = vadd.xlane.f32.xlu0 %v417
        %v424 = vpop.xlane.xlu0 %423
        %425 = vadd.xlane.f32.xlu0 %v418
        %v426 = vpop.xlane.xlu0 %425
        %v427 = vrcp.pop 128.0
        %v428 = vmul.f32 %v420, %v427
        %v429 = vmul.f32 %v422, %v427
        %v430 = vmul.f32 %v424, %v427
        %v431 = vmul.f32 %v426, %v427
        %v432 = vadd.f32 %v428, 1e-05
        %v433 = vadd.f32 %v429, 1e-05
        %v434 = vadd.f32 %v430, 1e-05
        %v435 = vadd.f32 %v431, 1e-05
        %v436 = vrsqrt.pop %v432
        %v437 = vrsqrt.pop %v433
        %v438 = vrsqrt.pop %v434
        %v439 = vrsqrt.pop %v435
        %v440 = vmul.f32 %v410, %v436
        %v441 = vmul.f32 %v411, %v437
        %v442 = vmul.f32 %v412, %v438
        %v443 = vmul.f32 %v413, %v439
        %v445 = vlaneseq
        %v446 = vshrl.u32 %v445, 7
        %v447 = vsub.s32 0, %v446
        %v448 = vrot.slane %v414, %v447
        %v450 = vmul.f32 %v440, %v448
        %v451 = vmul.f32 %v441, %v448
        %v452 = vmul.f32 %v442, %v448
        %v453 = vmul.f32 %v443, %v448
        %v454 = vpack.c.bf16 %v451, %v450
        %v455 = vpack.c.bf16 %v453, %v452
        %v456 = vld [vmem:[#allocation11] sm:$0xff]
        %v457 = vld [vmem:[#allocation11 + $0x8] sm:$0xff]
        %v458 = vld [vmem:[#allocation11 + $0x10] sm:$0xff]
        %v459 = vld [vmem:[#allocation11 + $0x18] sm:$0xff]
        %v460 = vld [vmem:[#allocation11 + $0x20] sm:$0xff]
        %v461 = vld [vmem:[#allocation11 + $0x28] sm:$0xff]
        %v462 = vld [vmem:[#allocation11 + $0x30] sm:$0xff]
        %v463 = vld [vmem:[#allocation11 + $0x38] sm:$0xff]
        %v464 = vld [vmem:[#allocation11 + $0x40] sm:$0xff]
        %v465 = vld [vmem:[#allocation11 + $0x48] sm:$0xff]
        %v466 = vld [vmem:[#allocation11 + $0x50] sm:$0xff]
        %v467 = vld [vmem:[#allocation11 + $0x58] sm:$0xff]
        %v468 = vld [vmem:[#allocation11 + $0x60] sm:$0xff]
        %v469 = vld [vmem:[#allocation11 + $0x68] sm:$0xff]
        %v470 = vld [vmem:[#allocation11 + $0x70] sm:$0xff]
        %v471 = vld [vmem:[#allocation11 + $0x78] sm:$0xff]
        %v472 = vld [vmem:[%s5] sm:$0x3]
        %v474 = vlaneseq
        %v475 = vshrl.u32 %v474, 7
        %v476 = vsub.s32 0, %v475
        %v477 = vrot.slane %v472, %v476
        %v478 = vlaneseq
        %v479 = vshrl.u32 %v478, 7
        %v480 = vsub.s32 1, %v479
        %v481 = vrot.slane %v472, %v480
        %v500 = vunpack.c.l.b16 %v456
        %v501 = vunpack.c.h.b16 %v456
        %v502 = vunpack.c.l.b16 %v457
        %v503 = vunpack.c.h.b16 %v457
        %v504 = vunpack.c.l.b16 %v458
        %v505 = vunpack.c.h.b16 %v458
        %v506 = vunpack.c.l.b16 %v459
        %v507 = vunpack.c.h.b16 %v459
        %v508 = vunpack.c.l.b16 %v460
        %v509 = vunpack.c.h.b16 %v460
        %v510 = vunpack.c.l.b16 %v461
        %v511 = vunpack.c.h.b16 %v461
        %v512 = vunpack.c.l.b16 %v462
        %v513 = vunpack.c.h.b16 %v462
        %v514 = vunpack.c.l.b16 %v463
        %v515 = vunpack.c.h.b16 %v463
        %v516 = vunpack.c.l.b16 %v464
        %v517 = vunpack.c.h.b16 %v464
        %v518 = vunpack.c.l.b16 %v465
        %v519 = vunpack.c.h.b16 %v465
        %v520 = vunpack.c.l.b16 %v466
        %v521 = vunpack.c.h.b16 %v466
        %v522 = vunpack.c.l.b16 %v467
        %v523 = vunpack.c.h.b16 %v467
        %v524 = vunpack.c.l.b16 %v468
        %v525 = vunpack.c.h.b16 %v468
        %v526 = vunpack.c.l.b16 %v469
        %v527 = vunpack.c.h.b16 %v469
        %v528 = vunpack.c.l.b16 %v470
        %v529 = vunpack.c.h.b16 %v470
        %v530 = vunpack.c.l.b16 %v471
        %v531 = vunpack.c.h.b16 %v471
        %v532 = vpack.c.b16 %v502, %v500
        %v533 = vpack.c.b16 %v503, %v501
        %v534 = vpack.c.b16 %v506, %v504
        %v535 = vpack.c.b16 %v507, %v505
        %v536 = vpack.c.b16 %v510, %v508
        %v537 = vpack.c.b16 %v511, %v509
        %v538 = vpack.c.b16 %v514, %v512
        %v539 = vpack.c.b16 %v515, %v513
        %v540 = vpack.c.b16 %v518, %v516
        %v541 = vpack.c.b16 %v519, %v517
        %v542 = vpack.c.b16 %v522, %v520
        %v543 = vpack.c.b16 %v523, %v521
        %v544 = vpack.c.b16 %v526, %v524
        %v545 = vpack.c.b16 %v527, %v525
        %v546 = vpack.c.b16 %v530, %v528
        %v547 = vpack.c.b16 %v531, %v529
        %564 = vmatprep.subr.bf16.mxu0 %v547
        %565 = vmatpush1.bf16.msra.mxu0 %v546
        %566 = vmatprep.subr.bf16.mxu0 %v545
        %567 = vmatpush1.bf16.msra.mxu0 %v544
        %568 = vmatprep.subr.bf16.mxu0 %v543
        %569 = vmatpush1.bf16.msra.mxu0 %v542
        %570 = vmatprep.subr.bf16.mxu0 %v541
        %571 = vmatpush1.bf16.msra.mxu0 %v540
        %572 = vmatprep.subr.bf16.mxu0 %v539
        %573 = vmatpush1.bf16.msra.mxu0 %v538
        %574 = vmatprep.subr.bf16.mxu0 %v537
        %575 = vmatpush1.bf16.msra.mxu0 %v536
        %576 = vmatprep.subr.bf16.mxu0 %v535
        %577 = vmatpush1.bf16.msra.mxu0 %v534
        %578 = vmatprep.subr.bf16.mxu0 %v533
        %579 = vmatpush1.bf16.msra.mxu0 %v532
        %580 = vmatprep.subr.bf16.mxu0 0
        %581 = vmatpush2.bf16.msra.mxu0 0
        %582 = vmatprep.subr.bf16.mxu0 0
        %583 = vmatpush2.bf16.msra.mxu0 0
        %584 = vmatprep.subr.bf16.mxu0 0
        %585 = vmatpush2.bf16.msra.mxu0 0
        %586 = vmatprep.subr.bf16.mxu0 0
        %587 = vmatpush2.bf16.msra.mxu0 0
        %588 = vmatprep.subr.bf16.mxu0 0
        %589 = vmatpush2.bf16.msra.mxu0 0
        %590 = vmatprep.subr.bf16.mxu0 0
        %591 = vmatpush2.bf16.msra.mxu0 0
        %592 = vmatprep.subr.bf16.mxu0 0
        %593 = vmatpush2.bf16.msra.mxu0 0
        %594 = vmatprep.subr.bf16.mxu0 0
        %595 = vmatpush2.bf16.msra.mxu0 0
        %596 = vmatprep.mubr.bf16.mxu0 0
        %597 = vmatmul.mubr.bf16.gmra.mxu0 %v454
        %v598 = vpop.f32.mrf.mxu0
        %v599 = vadd.f32 %v477, %v598
        %v600 = vpop.f32.mrf.mxu0
        %v601 = vadd.f32 %v481, %v600
        %v602 = vpop.f32.mrf.mxu0
        %v603 = vadd.f32 %v477, %v602
        %v604 = vpop.f32.mrf.mxu0
        %v605 = vadd.f32 %v481, %v604
        %606 = vmatprep.mubr.bf16.mxu0 0
        %607 = vmatmul.mubr.bf16.gmra.mxu0 %v455
        %v608 = vpop.f32.mrf.mxu0
        %v609 = vadd.f32 %v477, %v608
        %v610 = vpop.f32.mrf.mxu0
        %v611 = vadd.f32 %v481, %v610
        %v612 = vpop.f32.mrf.mxu0
        %v613 = vadd.f32 %v477, %v612
        %v614 = vpop.f32.mrf.mxu0
        %v615 = vadd.f32 %v481, %v614
        %616 = vdwg.mxu0
        %v617 = vpack.c.bf16 %v603, %v599
        %v618 = vpack.c.bf16 %v613, %v609
        %v619 = vpack.c.bf16 %v605, %v601
        %v620 = vpack.c.bf16 %v615, %v611
        %v621 = vld [vmem:[#allocation8] sm:$0xf]
        %v622 = vld [vmem:[#allocation8 + $0x4] sm:$0xf]
        %v625 = vunpack.c.l.b16 %v621
        %v626 = vunpack.c.l.b16 %v622
        %v627 = vpack.c.b16 %v626, %v625
        %629 = vmatprep.subr.bf16.mxu0 0
        %630 = vmatpush1.bf16.xpose.msra.mxu0 0
        %631 = vmatprep.subr.bf16.mxu0 0
        %632 = vmatpush1.bf16.xpose.msra.mxu0 0
        %633 = vmatprep.subr.bf16.mxu0 0
        %634 = vmatpush1.bf16.xpose.msra.mxu0 0
        %635 = vmatprep.subr.bf16.mxu0 0
        %636 = vmatpush1.bf16.xpose.msra.mxu0 0
        %637 = vmatprep.subr.bf16.mxu0 0
        %638 = vmatpush1.bf16.xpose.msra.mxu0 0
        %639 = vmatprep.subr.bf16.mxu0 0
        %640 = vmatpush1.bf16.xpose.msra.mxu0 0
        %641 = vmatprep.subr.bf16.mxu0 0
        %642 = vmatpush1.bf16.xpose.msra.mxu0 %v618
        %643 = vmatprep.subr.bf16.mxu0 0
        %644 = vmatpush1.bf16.xpose.msra.mxu0 %v617
        %645 = vmatprep.subr.bf16.mxu0 0
        %646 = vmatpush2.bf16.xpose.msra.mxu0 0
        %647 = vmatprep.subr.bf16.mxu0 0
        %648 = vmatpush2.bf16.xpose.msra.mxu0 0
        %649 = vmatprep.subr.bf16.mxu0 0
        %650 = vmatpush2.bf16.xpose.msra.mxu0 0
        %651 = vmatprep.subr.bf16.mxu0 0
        %652 = vmatpush2.bf16.xpose.msra.mxu0 0
        %653 = vmatprep.subr.bf16.mxu0 0
        %654 = vmatpush2.bf16.xpose.msra.mxu0 0
        %655 = vmatprep.subr.bf16.mxu0 0
        %656 = vmatpush2.bf16.xpose.msra.mxu0 0
        %657 = vmatprep.subr.bf16.mxu0 0
        %658 = vmatpush2.bf16.xpose.msra.mxu0 0
        %659 = vmatprep.subr.bf16.mxu0 0
        %660 = vmatpush2.bf16.xpose.msra.mxu0 0
        %661 = vmatprep.mubr.bf16.mxu0 0
        %662 = vmatmul.mubr.bf16.gmra.mxu0 %v627
        %v663 = vpop.f32.mrf.mxu0
        %v664 = vadd.f32 0.0, %v663
        %v665 = vpop.f32.mrf.mxu0
        %v666 = vpop.f32.mrf.mxu0
        %v667 = vadd.f32 0.0, %v666
        %v668 = vpop.f32.mrf.mxu0
        %669 = vdwg.mxu0
        %v670 = vld [vmem:[#allocation2] sm:$0xff]
        %v671 = vld [vmem:[#allocation2 + $0x8] sm:$0xff]
        %vm672 = vcmask 261120
        %v673 = vsel %vm672, %v664, -inf
        %674 = vmax.xlane.f32.xlu0 %v673
        %v675 = vpop.xlane.xlu0 %674
        %v676 = vsel %vm672, %v667, -inf
        %677 = vmax.xlane.f32.xlu0 %v676
        %v678 = vpop.xlane.xlu0 %677
        %v679 = vmax.f32 %v670, %v675
        %v680 = vmax.f32 %v671, %v678
        %v681 = vsub.f32 %v670, %v679
        %v682 = vsub.f32 %v671, %v680
        %v683 = vmul.f32 %v681, 1.442695
        %v684 = vpow.pop %v683
        %v685 = vmul.f32 %v682, 1.442695
        %v686 = vpow.pop %v685
        %688 = vset.pattern.permute.xlu0 0
        %689 = vperm.xlu0 %688, %v679
        %v690 = vpop.permute.xlu0 %689
        %693 = vset.pattern.permute.xlu0 0
        %694 = vperm.xlu0 %693, %v680
        %v695 = vpop.permute.xlu0 %694
        %v697 = vsub.f32 %v664, %v690
        %v698 = vsub.f32 %v667, %v695
        %v699 = vmul.f32 %v697, 1.442695
        %v700 = vpow.pop %v699
        %v701 = vmul.f32 %v698, 1.442695
        %v702 = vpow.pop %v701
        %v703 = vld [vmem:[#allocation3] sm:$0xff]
        %v704 = vld [vmem:[#allocation3 + $0x8] sm:$0xff]
        %v705 = vmul.f32 %v684, %v703
        %v706 = vmul.f32 %v686, %v704
        %v707 = vsel %vm672, %v700, 0.0
        %708 = vadd.xlane.f32.xlu0 %v707
        %v709 = vpop.xlane.xlu0 %708
        %v710 = vsel %vm672, %v702, 0.0
        %711 = vadd.xlane.f32.xlu0 %v710
        %v712 = vpop.xlane.xlu0 %711
        %v713 = vadd.f32 %v705, %v709
        %v714 = vadd.f32 %v706, %v712
        %vm715 = vcmask 7168
        %716 = vst.msk [vmem:[#allocation3] sm:$0xff] %vm715, %v713
        %717 = vst.msk [vmem:[#allocation3 + $0x8] sm:$0xff] %vm715, %v714
        %v718 = vld [vmem:[#allocation4] sm:$0xff]
        %v719 = vld [vmem:[#allocation4 + $0x8] sm:$0xff]
        %721 = vset.pattern.permute.xlu0 0
        %722 = vperm.xlu0 %721, %v684
        %v723 = vpop.permute.xlu0 %722
        %726 = vset.pattern.permute.xlu0 0
        %727 = vperm.xlu0 %726, %v686
        %v728 = vpop.permute.xlu0 %727
        %v730 = vmul.f32 %v723, %v718
        %v731 = vmul.f32 %v728, %v719
        %v732 = vpack.c.bf16 %v702, %v700
        %v734 = vsel %vm672, %v732, 0
        %736 = vmatprep.subr.bf16.mxu0 0
        %737 = vmatpush1.bf16.msra.mxu0 0
        %738 = vmatprep.subr.bf16.mxu0 0
        %739 = vmatpush1.bf16.msra.mxu0 0
        %740 = vmatprep.subr.bf16.mxu0 0
        %741 = vmatpush1.bf16.msra.mxu0 0
        %742 = vmatprep.subr.bf16.mxu0 0
        %743 = vmatpush1.bf16.msra.mxu0 0
        %744 = vmatprep.subr.bf16.mxu0 0
        %745 = vmatpush1.bf16.msra.mxu0 0
        %746 = vmatprep.subr.bf16.mxu0 0
        %747 = vmatpush1.bf16.msra.mxu0 0
        %748 = vmatprep.subr.bf16.mxu0 0
        %749 = vmatpush1.bf16.msra.mxu0 %v620
        %750 = vmatprep.subr.bf16.mxu0 0
        %751 = vmatpush1.bf16.msra.mxu0 %v619
        %752 = vmatprep.subr.bf16.mxu0 0
        %753 = vmatpush2.bf16.msra.mxu0 0
        %754 = vmatprep.subr.bf16.mxu0 0
        %755 = vmatpush2.bf16.msra.mxu0 0
        %756 = vmatprep.subr.bf16.mxu0 0
        %757 = vmatpush2.bf16.msra.mxu0 0
        %758 = vmatprep.subr.bf16.mxu0 0
        %759 = vmatpush2.bf16.msra.mxu0 0
        %760 = vmatprep.subr.bf16.mxu0 0
        %761 = vmatpush2.bf16.msra.mxu0 0
        %762 = vmatprep.subr.bf16.mxu0 0
        %763 = vmatpush2.bf16.msra.mxu0 0
        %764 = vmatprep.subr.bf16.mxu0 0
        %765 = vmatpush2.bf16.msra.mxu0 0
        %766 = vmatprep.subr.bf16.mxu0 0
        %767 = vmatpush2.bf16.msra.mxu0 0
        %768 = vmatprep.mubr.bf16.mxu0 0
        %769 = vmatmul.mubr.bf16.gmra.mxu0 %v734
        %v770 = vpop.f32.mrf.mxu0
        %v771 = vadd.f32 0.0, %v770
        %v772 = vpop.f32.mrf.mxu0
        %v773 = vpop.f32.mrf.mxu0
        %v774 = vadd.f32 0.0, %v773
        %v775 = vpop.f32.mrf.mxu0
        %776 = vdwg.mxu0
        %v777 = vadd.f32 %v730, %v771
        %v778 = vadd.f32 %v731, %v774
        %779 = vst [vmem:[#allocation4] sm:$0xff] %v777
        %780 = vst [vmem:[#allocation4 + $0x8] sm:$0xff] %v778
        %781 = vst.msk [vmem:[#allocation2] sm:$0xff] %vm715, %v679
        %782 = vst.msk [vmem:[#allocation2 + $0x8] sm:$0xff] %vm715, %v680
        // Predicated region
        $region77: #{tpu_custom_call.1} parent=51 // pred_check
          %p783 = pneg %p399
        $region78: #{tpu_custom_call.1} parent=51 // pred_check_branch
          %785 = sbr.rel (%p783) target = $region80
        $region79: #{tpu_custom_call.1} parent=51 // pred_region
          %v786 = vld [vmem:[#allocation4] sm:$0xff]
          %v787 = vld [vmem:[#allocation4 + $0x8] sm:$0xff]
          %v788 = vld [vmem:[#allocation3] sm:$0xff]
          %v789 = vld [vmem:[#allocation3 + $0x8] sm:$0xff]
          %791 = vset.pattern.permute.xlu0 0
          %792 = vperm.xlu0 %791, %v788
          %v793 = vpop.permute.xlu0 %792
          %796 = vset.pattern.permute.xlu0 0
          %797 = vperm.xlu0 %796, %v789
          %v798 = vpop.permute.xlu0 %797
          %v800 = vrcp.pop %v793
          %v801 = vmul.f32 %v786, %v800
          %v802 = vrcp.pop %v798
          %v803 = vmul.f32 %v787, %v802
          %v804 = vld [vmem:[#allocation10] sm:$0xff]
          %v805 = vld [vmem:[#allocation10 + $0x8] sm:$0xff]
          %v806 = vmul.f32 %v801, %v804
          %v807 = vmul.f32 %v803, %v805
          %v808 = vadd.f32 %v806, %v807
          %v809 = vrot.slane %v808, 4
          %v810 = vadd.f32 %v808, %v809
          %v811 = vrot.slane %v810, 2
          %v812 = vadd.f32 %v810, %v811
          %v813 = vrot.slane %v812, 1
          %v814 = vadd.f32 %v812, %v813
          %v815 = vpack.c.bf16 %v814, %v814
          %v816 = vld [vmem:[#allocation13] sm:$0xf]
          %v817 = vld [vmem:[#allocation13 + $0x4] sm:$0xf]
          %v818 = vld [vmem:[#allocation13 + $0x8] sm:$0xf]
          %v819 = vld [vmem:[#allocation13 + $0xc] sm:$0xf]
          %v820 = vld [vmem:[#allocation13 + $0x10] sm:$0xf]
          %v821 = vld [vmem:[#allocation13 + $0x14] sm:$0xf]
          %v822 = vld [vmem:[#allocation13 + $0x18] sm:$0xf]
          %v823 = vld [vmem:[#allocation13 + $0x1c] sm:$0xf]
          %v824 = vld [vmem:[#allocation13 + $0x20] sm:$0xf]
          %v825 = vld [vmem:[#allocation13 + $0x24] sm:$0xf]
          %v826 = vld [vmem:[#allocation13 + $0x28] sm:$0xf]
          %v827 = vld [vmem:[#allocation13 + $0x2c] sm:$0xf]
          %v828 = vld [vmem:[#allocation13 + $0x30] sm:$0xf]
          %v829 = vld [vmem:[#allocation13 + $0x34] sm:$0xf]
          %v830 = vld [vmem:[#allocation13 + $0x38] sm:$0xf]
          %v831 = vld [vmem:[#allocation13 + $0x3c] sm:$0xf]
          %v832 = vld [vmem:[%s7] sm:$0x1]
          %v849 = vunpack.c.l.b16 %v816
          %v850 = vunpack.c.l.b16 %v817
          %v851 = vunpack.c.l.b16 %v818
          %v852 = vunpack.c.l.b16 %v819
          %v853 = vunpack.c.l.b16 %v820
          %v854 = vunpack.c.l.b16 %v821
          %v855 = vunpack.c.l.b16 %v822
          %v856 = vunpack.c.l.b16 %v823
          %v857 = vunpack.c.l.b16 %v824
          %v858 = vunpack.c.l.b16 %v825
          %v859 = vunpack.c.l.b16 %v826
          %v860 = vunpack.c.l.b16 %v827
          %v861 = vunpack.c.l.b16 %v828
          %v862 = vunpack.c.l.b16 %v829
          %v863 = vunpack.c.l.b16 %v830
          %v864 = vunpack.c.l.b16 %v831
          %v865 = vpack.c.b16 %v850, %v849
          %v866 = vpack.c.b16 %v852, %v851
          %v867 = vpack.c.b16 %v854, %v853
          %v868 = vpack.c.b16 %v856, %v855
          %v869 = vpack.c.b16 %v858, %v857
          %v870 = vpack.c.b16 %v860, %v859
          %v871 = vpack.c.b16 %v862, %v861
          %v872 = vpack.c.b16 %v864, %v863
          %881 = vmatprep.subr.bf16.mxu0 0
          %882 = vmatpush1.bf16.msra.mxu0 %v872
          %883 = vmatprep.subr.bf16.mxu0 0
          %884 = vmatpush1.bf16.msra.mxu0 %v871
          %885 = vmatprep.subr.bf16.mxu0 0
          %886 = vmatpush1.bf16.msra.mxu0 %v870
          %887 = vmatprep.subr.bf16.mxu0 0
          %888 = vmatpush1.bf16.msra.mxu0 %v869
          %889 = vmatprep.subr.bf16.mxu0 0
          %890 = vmatpush1.bf16.msra.mxu0 %v868
          %891 = vmatprep.subr.bf16.mxu0 0
          %892 = vmatpush1.bf16.msra.mxu0 %v867
          %893 = vmatprep.subr.bf16.mxu0 0
          %894 = vmatpush1.bf16.msra.mxu0 %v866
          %895 = vmatprep.subr.bf16.mxu0 0
          %896 = vmatpush1.bf16.msra.mxu0 %v865
          %897 = vmatprep.subr.bf16.mxu0 0
          %898 = vmatpush2.bf16.msra.mxu0 0
          %899 = vmatprep.subr.bf16.mxu0 0
          %900 = vmatpush2.bf16.msra.mxu0 0
          %901 = vmatprep.subr.bf16.mxu0 0
          %902 = vmatpush2.bf16.msra.mxu0 0
          %903 = vmatprep.subr.bf16.mxu0 0
          %904 = vmatpush2.bf16.msra.mxu0 0
          %905 = vmatprep.subr.bf16.mxu0 0
          %906 = vmatpush2.bf16.msra.mxu0 0
          %907 = vmatprep.subr.bf16.mxu0 0
          %908 = vmatpush2.bf16.msra.mxu0 0
          %909 = vmatprep.subr.bf16.mxu0 0
          %910 = vmatpush2.bf16.msra.mxu0 0
          %911 = vmatprep.subr.bf16.mxu0 0
          %912 = vmatpush2.bf16.msra.mxu0 0
          %913 = vmatprep.mubr.bf16.mxu0 0
          %914 = vmatmul.mubr.bf16.gmra.mxu0 %v815
          %v915 = vpop.f32.mrf.mxu0
          %v916 = vadd.f32 %v832, %v915
          %v917 = vpop.f32.mrf.mxu0
          %v918 = vpop.f32.mrf.mxu0
          %v919 = vpop.f32.mrf.mxu0
          %920 = vdwg.mxu0
          %921 = vst [vmem:[%s396] sm:$0x1] %v916
        $region80: #{tpu_custom_call.1} parent=51 // pred_fallthru
          _
        %s922 = sand.u32 %s222, 1
        %s923 = scalar_lea.sflag [#allocation7], %s922
        %s924 = sand.u32 %s222, 1
        %s925 = scalar_lea.vmem [#allocation14], %s924
        // Predicated region
        $region81: #{tpu_custom_call.1} parent=51 // pred_check
          %p926 = pneg %p232
        $region82: #{tpu_custom_call.1} parent=51 // pred_check_branch
          %928 = sbr.rel (%p926) target = $region84
        $region83: #{tpu_custom_call.1} parent=51 // pred_region
          %s930 = ssub.s32 16, 16
          %931 = vsyncadd %s923, %s930
          %s932 = smul.addr %s31, 16
          %s933 = scalar_lea.hbm %s8, %s932
          %s935 = sshll.u32 %s925, 4
          %s936 = int_to_ptr.vmem [resolvable:$true] %s935
          %938 = dma.vmem_to_hbm [thread:$0]  %s936, 16, %s933, %s923
        $region84: #{tpu_custom_call.1} parent=51 // pred_fallthru
          _
      $region52: #{tpu_custom_call.1} parent=5 // pred_fallthru
        _
      %p939 = scmp.le.s32.totalorder 2, %s22
      // Predicated region
      $region85: #{tpu_custom_call.1} parent=5 // pred_check
        %p940 = pneg %p939
      $region86: #{tpu_custom_call.1} parent=5 // pred_check_branch
        %942 = sbr.rel (%p940) target = $region88
      $region87: #{tpu_custom_call.1} parent=5 // pred_region
        %s943 = ssub.s32 %s22, 2
        // Predicated region
        $region89: #{tpu_custom_call.1} parent=87 // pred_check
          %p944 = pneg %p238
        $region90: #{tpu_custom_call.1} parent=87 // pred_check_branch
          %946 = sbr.rel (%p944) target = $region92
        $region91: #{tpu_custom_call.1} parent=87 // pred_region
          %s947 = sand.u32 %s223, 1
          %s948 = scalar_lea.sflag [#allocation7], %s947
          %s949 = sand.u32 %s223, 1
          %s950 = scalar_lea.vmem [#allocation14], %s949
          %951 = dma.done %s948, 16
        $region92: #{tpu_custom_call.1} parent=87 // pred_fallthru
          _
      $region88: #{tpu_custom_call.1} parent=5 // pred_fallthru
        _
    $region6: #{tpu_custom_call.1} parent=1 // loop_footer
      %s26 = sadd.s32 1, %s22
    $region7: #{tpu_custom_call.1} parent=1 // loop_footer_branch
      %21 = sbr.rel target = $region3
    $region8: #{tpu_custom_call.1} parent=1 // loop_exit
      _
    %952 = vsyncpa [#allocation6], 1
    %s953 = scalar_lea.sflag [#allocation6], 1
    %954 = vsyncpa %s953, 1
    %955 = vsyncpa [#allocation9], 1
    %956 = vsyncpa [#allocation12], 1
    %957 = vsyncpa [#allocation7], 1
    %s958 = scalar_lea.sflag [#allocation7], 1
    %959 = vsyncpa %s958, 1

</llo_original>
